<compile_context>
chip_gen: v7x
topology: tpu7x:2x2x1
jax: 0.10.0
libtpu: 0.0.40
codegen_flags: <defaults>
</compile_context>

<pallas_src>
import numpy as np
import jax
import jax.numpy as jnp
from jax.experimental import pallas as pl
from jax.experimental.pallas import tpu as pltpu

NUM_CLASSES = 10
CLS_PAD = 128                  # lane-dense output width (classes padded to 128)
CIN, COUT, K = 1, 16, 3
H = W = 6                      # 6x6 input -> conv(pad=1) 6x6 -> pool/2 -> 3x3 -> 16*3*3 = 144
POOLED = 3 * 3
OUT_FEATS = COUT * POOLED      # 144
EXT_FEATS = OUT_FEATS + 1      # 145: column 144 is the constant-1 channel (carries fc bias)
IN_PIXELS = H * W              # 36
BIAS_LANE = IN_PIXELS          # lane 36 of each input row is a constant 1.0
PAD_IN = 64                    # streamed-operand lane width (36 px + bias + zero pad)
NEG_PAD = -1.0e30              # drives padded class columns to -inf-like logits


# ----------------------------------------------------------------------------
# Kernel: 4 folded conv GEMMs -> pool-max -> single ReLU -> fc GEMM -> log_softmax
# ----------------------------------------------------------------------------
def smallcnn_kernel(x_ref, wk_ref, wfc_ref, out_ref):
    """x_ref [T,64] bf16, wk_ref [4,64,145] bf16, wfc_ref [145,128] bf16."""
    x = x_ref[...]
    pooled = jnp.dot(x, wk_ref[0], preferred_element_type=jnp.float32)
    for k in range(1, 4):                               # 4 positions of the 2x2 pool window
        pooled = jnp.maximum(
            pooled, jnp.dot(x, wk_ref[k], preferred_element_type=jnp.float32))
    pooled = jnp.maximum(pooled, 0.0)                   # single ReLU (monotone, commutes w/ max)
    logits = jnp.dot(pooled.astype(jnp.bfloat16), wfc_ref[...],
                     preferred_element_type=jnp.float32)  # fc + bias; pad cols = -1e30
    m = jnp.max(logits, axis=-1, keepdims=True)
    shifted = logits - m
    lse = jnp.log(jnp.sum(jnp.exp(shifted), axis=-1, keepdims=True))
    out_ref[...] = shifted - lse                        # log_softmax(dim=1), lane-dense


# ----------------------------------------------------------------------------
# One-time host-side weight packing (PyTorch conventions in).
# ----------------------------------------------------------------------------
def pack_params(wconv_pt, bconv_pt, wfc_pt, bfc_pt):
    wconv = np.asarray(wconv_pt, np.float32)   # [16,1,3,3]
    bconv = np.asarray(bconv_pt, np.float32)   # [16]
    wfc = np.asarray(wfc_pt, np.float32)       # [C,144]  (PyTorch flatten: ch*9 + cell)
    bfc = np.asarray(bfc_pt, np.float32)       # [C]

    # Fold im2col + conv into 4 dense matrices, one per pool-window position.
    wk = np.zeros((4, PAD_IN, EXT_FEATS), np.float32)
    for dh in range(2):
        for dw in range(2):
            kpos = dh * 2 + dw
            for ph in range(3):
                for pw in range(3):
                    s = ph * 3 + pw
                    for kh in range(K):
                        for kw in range(K):
                            h = 2 * ph + dh + kh - 1     # conv padding = 1
                            w = 2 * pw + dw + kw - 1
                            if 0 <= h < H and 0 <= w < W:
                                p = h * W + w
                                wk[kpos, p, s * COUT:(s + 1) * COUT] += wconv[:, 0, kh, kw]
            wk[kpos, BIAS_LANE, :OUT_FEATS] = np.tile(bconv, POOLED)   # conv bias
            wk[kpos, BIAS_LANE, OUT_FEATS] = 1.0    # constant-1 channel -> fc bias row

    # fc: permute PyTorch's channel-major flatten to the kernel's cell-major
    # layout (col = s*16 + c), append the bias row, and pad classes to 128
    # lanes with a -1e30 bias so log_softmax ignores the pad columns.
    wfc_perm = wfc.reshape(NUM_CLASSES, COUT, POOLED).transpose(2, 1, 0)
    wfc_ext = np.zeros((EXT_FEATS, CLS_PAD), np.float32)
    wfc_ext[:OUT_FEATS, :NUM_CLASSES] = wfc_perm.reshape(OUT_FEATS, NUM_CLASSES)
    wfc_ext[OUT_FEATS, :NUM_CLASSES] = bfc
    wfc_ext[OUT_FEATS, NUM_CLASSES:] = NEG_PAD

    return jnp.asarray(wk, jnp.bfloat16), jnp.asarray(wfc_ext, jnp.bfloat16)


# ----------------------------------------------------------------------------
# Forward wrapper: bf16 lane-dense input prep + gridded pallas_call.
# ----------------------------------------------------------------------------
def _round_up(n, m):
    return -(-n // m) * m


def _choose_tile_n(N, max_tile=2048):
    """Batch tile: <=2048 (v5e-safe with explicit vmem limit), multiple of 16,
    and >=2 grid steps once there is enough work so both v7x TCs participate."""
    n16 = _round_up(max(N, 1), 16)
    if n16 <= 512:
        return n16                              # tiny batch: one small tile
    if n16 <= max_tile:
        return _round_up(-(-n16 // 2), 16)      # split into 2 tiles (v7x dual-TC)
    return max_tile


def smallcnn_forward(x, wk, wfc_ext, *, tile_n=None):
    """x: [N, 1, 6, 6] f32 NCHW (6x6 spatial is what view(-1, 16*3*3) implies)."""
    N = x.shape[0]
    if tile_n is None:
        tile_n = _choose_tile_n(N)
    n_pad = _round_up(N, tile_n)

    # Streamed operand (built directly in bf16, one concat + one pad):
    # 36 pixels | constant-1 bias lane | zero pad to 64 lanes.
    x_flat = jnp.concatenate(
        [x.reshape(N, IN_PIXELS).astype(jnp.bfloat16),
         jnp.ones((N, 1), jnp.bfloat16),
         jnp.zeros((N, PAD_IN - IN_PIXELS - 1), jnp.bfloat16)], axis=1)
    x_flat = jnp.pad(x_flat, ((0, n_pad - N), (0, 0)))

    out = pl.pallas_call(
        smallcnn_kernel,
        out_shape=jax.ShapeDtypeStruct((n_pad, CLS_PAD), jnp.float32),
        grid=(n_pad // tile_n,),
        in_specs=[
            pl.BlockSpec((tile_n, PAD_IN), lambda i: (i, 0)),           # streamed image rows
            pl.BlockSpec((4, PAD_IN, EXT_FEATS), lambda i: (0, 0, 0)),  # folded conv weights (resident)
            pl.BlockSpec((EXT_FEATS, CLS_PAD), lambda i: (0, 0)),       # fc weights (resident)
        ],
        out_specs=pl.BlockSpec((tile_n, CLS_PAD), lambda i: (i, 0)),    # lane-dense output
        compiler_params=pltpu.CompilerParams(
            dimension_semantics=("parallel",),
            vmem_limit_bytes=32 * 1024 * 1024),
    )(x_flat, wk, wfc_ext)
    return out[:N, :NUM_CLASSES]


# ----------------------------------------------------------------------------
# Pure-numpy reference mirroring the PyTorch forward (for validation).
# ----------------------------------------------------------------------------
def _bf16(a):
    return np.asarray(jnp.asarray(a).astype(jnp.bfloat16).astype(jnp.float32))


def reference_np(x, wconv, bconv, wfc, bfc):
    x = np.asarray(x, np.float32)
    wconv = np.asarray(wconv, np.float32)
    N = x.shape[0]
    xp = np.pad(x[:, 0], ((0, 0), (1, 1), (1, 1)))
    conv = np.zeros((N, COUT, H, W), np.float32)
    for c in range(COUT):
        for i in range(H):
            for j in range(W):
                conv[:, c, i, j] = (xp[:, i:i + 3, j:j + 3] * wconv[c, 0]).sum(axis=(1, 2)) + bconv[c]
    conv = np.maximum(conv, 0.0)
    pooled = conv.reshape(N, COUT, 3, 2, 3, 2).max(axis=(3, 5))
    # Mirror the kernel's bf16 fc path (bf16 pooled x bf16 weights, f32 accumulate).
    pooled_flat = _bf16(pooled.reshape(N, OUT_FEATS))
    logits = pooled_flat @ _bf16(wfc).T + _bf16(bfc)
    m = logits.max(axis=1, keepdims=True)
    shifted = logits - m
    lse = np.log(np.exp(shifted).sum(axis=1, keepdims=True))
    return shifted - lse


if __name__ == "__main__":
    key = jax.random.PRNGKey(0)
    kx, k1, k2, k3, k4 = jax.random.split(key, 5)

    x = jax.random.normal(kx, (2, CIN, H, W), jnp.float32)            # NCHW, like PyTorch
    wconv = jax.random.normal(k1, (COUT, CIN, K, K), jnp.float32) * 0.1
    bconv = jax.random.normal(k2, (COUT,), jnp.float32) * 0.1
    wfc = jax.random.normal(k3, (NUM_CLASSES, OUT_FEATS), jnp.float32) * 0.1
    bfc = jax.random.normal(k4, (NUM_CLASSES,), jnp.float32) * 0.1

    wk, wfc_ext = pack_params(wconv, bconv, wfc, bfc)    # one-time weight packing
    out = jax.block_until_ready(smallcnn_forward(x, wk, wfc_ext))

    # Validate against a numpy reference using the same bf16 quantization of
    # the streamed operand and of the folded conv / fc weights.
    ref = reference_np(_bf16(x), _bf16(wconv), _bf16(bconv),
                       np.asarray(wfc), np.asarray(bfc))
    np.testing.assert_allclose(np.asarray(out), ref, atol=2e-3, rtol=2e-3)

    print("KERNEL_OK")
</pallas_src>

<mosaic_0001>
module attributes {stable_mosaic.version = 11 : i64} {
  func.func @smallcnn_kernel(%arg0: i32, %arg1: memref<16x64xbf16, #tpu.memory_space<vmem>>, %arg2: memref<4x64x145xbf16, #tpu.memory_space<vmem>>, %arg3: memref<145x128xbf16, #tpu.memory_space<vmem>>, %arg4: memref<16x128xf32, #tpu.memory_space<vmem>>) attributes {dimension_semantics = [#tpu.dimension_semantics<parallel>], iteration_bounds = array<i64: 1>, scalar_prefetch = 0 : i64, scratch_operands = 0 : i64, tpu.core_type = #tpu.core_type<tc>, window_params = [{transform_indices = @transform_0, window_bounds = array<i64: 16, 64>}, {pipeline_mode = #tpu.pipeline_mode<synchronous>, transform_indices = @transform_1, window_bounds = array<i64: 4, 64, 145>}, {pipeline_mode = #tpu.pipeline_mode<synchronous>, transform_indices = @transform_2, window_bounds = array<i64: 145, 128>}, {transform_indices = @transform_3, window_bounds = array<i64: 16, 128>}]} {
    %c0 = arith.constant 0 : index
    %c0_0 = arith.constant 0 : index
    %0 = vector.load %arg1[%c0, %c0_0] : memref<16x64xbf16, #tpu.memory_space<vmem>>, vector<16x64xbf16>
    %c0_1 = arith.constant 0 : index
    %c0_2 = arith.constant 0 : index
    %c0_3 = arith.constant 0 : index
    %1 = vector.load %arg2[%c0_1, %c0_2, %c0_3] : memref<4x64x145xbf16, #tpu.memory_space<vmem>>, vector<1x64x145xbf16>
    %2 = vector.shape_cast %1 : vector<1x64x145xbf16> to vector<64x145xbf16>
    %cst = arith.constant dense<0.000000e+00> : vector<16x145xf32>
    %3 = tpu.matmul %0, %2, %cst {dimension_numbers = #tpu.dot_dimension_numbers<[1], [0], [0], [1], [0, 0, 1, 1], [], []>} : vector<16x64xbf16>, vector<64x145xbf16>, vector<16x145xf32> -> vector<16x145xf32>
    %c1 = arith.constant 1 : index
    %c0_4 = arith.constant 0 : index
    %c0_5 = arith.constant 0 : index
    %4 = vector.load %arg2[%c1, %c0_4, %c0_5] : memref<4x64x145xbf16, #tpu.memory_space<vmem>>, vector<1x64x145xbf16>
    %5 = vector.shape_cast %4 : vector<1x64x145xbf16> to vector<64x145xbf16>
    %cst_6 = arith.constant dense<0.000000e+00> : vector<16x145xf32>
    %6 = tpu.matmul %0, %5, %cst_6 {dimension_numbers = #tpu.dot_dimension_numbers<[1], [0], [0], [1], [0, 0, 1, 1], [], []>} : vector<16x64xbf16>, vector<64x145xbf16>, vector<16x145xf32> -> vector<16x145xf32>
    %7 = arith.maximumf %3, %6 : vector<16x145xf32>
    %c2 = arith.constant 2 : index
    %c0_7 = arith.constant 0 : index
    %c0_8 = arith.constant 0 : index
    %8 = vector.load %arg2[%c2, %c0_7, %c0_8] : memref<4x64x145xbf16, #tpu.memory_space<vmem>>, vector<1x64x145xbf16>
    %9 = vector.shape_cast %8 : vector<1x64x145xbf16> to vector<64x145xbf16>
    %cst_9 = arith.constant dense<0.000000e+00> : vector<16x145xf32>
    %10 = tpu.matmul %0, %9, %cst_9 {dimension_numbers = #tpu.dot_dimension_numbers<[1], [0], [0], [1], [0, 0, 1, 1], [], []>} : vector<16x64xbf16>, vector<64x145xbf16>, vector<16x145xf32> -> vector<16x145xf32>
    %11 = arith.maximumf %7, %10 : vector<16x145xf32>
    %c3 = arith.constant 3 : index
    %c0_10 = arith.constant 0 : index
    %c0_11 = arith.constant 0 : index
    %12 = vector.load %arg2[%c3, %c0_10, %c0_11] : memref<4x64x145xbf16, #tpu.memory_space<vmem>>, vector<1x64x145xbf16>
    %13 = vector.shape_cast %12 : vector<1x64x145xbf16> to vector<64x145xbf16>
    %cst_12 = arith.constant dense<0.000000e+00> : vector<16x145xf32>
    %14 = tpu.matmul %0, %13, %cst_12 {dimension_numbers = #tpu.dot_dimension_numbers<[1], [0], [0], [1], [0, 0, 1, 1], [], []>} : vector<16x64xbf16>, vector<64x145xbf16>, vector<16x145xf32> -> vector<16x145xf32>
    %15 = arith.maximumf %11, %14 : vector<16x145xf32>
    %cst_13 = arith.constant 0.000000e+00 : f32
    %16 = vector.broadcast %cst_13 : f32 to vector<16x145xf32>
    %17 = arith.maximumf %15, %16 : vector<16x145xf32>
    %18 = arith.truncf %17 : vector<16x145xf32> to vector<16x145xbf16>
    %c0_14 = arith.constant 0 : index
    %c0_15 = arith.constant 0 : index
    %19 = vector.load %arg3[%c0_14, %c0_15] : memref<145x128xbf16, #tpu.memory_space<vmem>>, vector<145x128xbf16>
    %cst_16 = arith.constant dense<0.000000e+00> : vector<16x128xf32>
    %20 = tpu.matmul %18, %19, %cst_16 {dimension_numbers = #tpu.dot_dimension_numbers<[1], [0], [0], [1], [0, 0, 1, 1], [], []>} : vector<16x145xbf16>, vector<145x128xbf16>, vector<16x128xf32> -> vector<16x128xf32>
    %cst_17 = arith.constant dense<0xFF800000> : vector<16xf32>
    %21 = vector.multi_reduction <maximumf>, %20, %cst_17 [1] : vector<16x128xf32> to vector<16xf32>
    %22 = vector.shape_cast %21 : vector<16xf32> to vector<16x1xf32>
    %23 = vector.broadcast %22 : vector<16x1xf32> to vector<16x128xf32>
    %24 = arith.subf %20, %23 : vector<16x128xf32>
    %25 = math.exp %24 : vector<16x128xf32>
    %cst_18 = arith.constant dense<0.000000e+00> : vector<16xf32>
    %26 = vector.multi_reduction <add>, %25, %cst_18 [1] : vector<16x128xf32> to vector<16xf32>
    %27 = vector.shape_cast %26 : vector<16xf32> to vector<16x1xf32>
    %28 = math.log %27 : vector<16x1xf32>
    %29 = vector.broadcast %28 : vector<16x1xf32> to vector<16x128xf32>
    %30 = arith.subf %24, %29 : vector<16x128xf32>
    %c0_19 = arith.constant 0 : index
    %c0_20 = arith.constant 0 : index
    %31 = vector.load %arg4[%c0_19, %c0_20] : memref<16x128xf32, #tpu.memory_space<vmem>>, vector<16x128xf32>
    tpu.vector_store %arg4[%c0_19, %c0_20], %30 {strides = array<i32>} : memref<16x128xf32, #tpu.memory_space<vmem>>, vector<16x128xf32>,
    return
  }
  func.func @transform_0(%arg0: i32) -> (i32, i32) {
    %c0_i32 = arith.constant 0 : i32
    %c0_i32_0 = arith.constant 0 : i32
    return %arg0, %c0_i32 : i32, i32
  }
  func.func @transform_1(%arg0: i32) -> (i32, i32, i32) {
    %c0_i32 = arith.constant 0 : i32
    %c0_i32_0 = arith.constant 0 : i32
    %c0_i32_1 = arith.constant 0 : i32
    %c0_i32_2 = arith.constant 0 : i32
    return %c0_i32, %c0_i32_0, %c0_i32_1 : i32, i32, i32
  }
  func.func @transform_2(%arg0: i32) -> (i32, i32) {
    %c0_i32 = arith.constant 0 : i32
    %c0_i32_0 = arith.constant 0 : i32
    %c0_i32_1 = arith.constant 0 : i32
    return %c0_i32, %c0_i32_0 : i32, i32
  }
  func.func @transform_3(%arg0: i32) -> (i32, i32) {
    %c0_i32 = arith.constant 0 : i32
    %c0_i32_0 = arith.constant 0 : i32
    return %arg0, %c0_i32 : i32, i32
  }
}

</mosaic_0001>

<llo_original>
// kernel: tpu_custom_call.1
$region0: #{tpu_custom_call.1}
  #allocation0 [shape = 'u32[]', space=smem, size = 0x4, offset = 0x4, fixed_abs, tag = 'smem constant byte address 0x4 - core index']
  #allocation1 [shape = 'u32[144,128]{1,0:T(1,128)}', space=vmem, size = 0x12000, scoped, tag = 'internal scratch']
  %s0 = inlined_call_operand.hbm [shape: bf16[16,64], index: 0, kind: input, shape index: {}]
  %s1 = inlined_call_operand.hbm [shape: bf16[4,64,145], index: 1, kind: input, shape index: {}]
  %s2 = inlined_call_operand.hbm [shape: bf16[145,128], index: 2, kind: input, shape index: {}]
  %s3 = inlined_call_operand.hbm [shape: f32[16,128], index: 3, kind: output, shape index: {}]
  %s4 = sld [smem:[#allocation0]]
  $region34: #{tpu_custom_call.1} parent=0
    _
  %s6 = ssub.s32 1, %s4
  %s7 = scalar_select 0, %s6, %s4
  $region1: #{tpu_custom_call.1} parent=0
    #allocation2 [shape = 'u8[4096]{0}', space=vmem, size = 0x1000, scoped, tag = 'input window, operand 0, single buffered']
    #allocation3 [shape = 's32[1]{0}', space=sflag, size = 0x4, scoped, tag = 'scoped memory for tpu_custom_call.1']
    #allocation4 [shape = 's32[1]{0}', space=sflag, size = 0x4, scoped, tag = 'scoped memory for tpu_custom_call.1']
    #allocation5 [shape = 'u8[131072]{0}', space=vmem, size = 0x20000, scoped, tag = 'input window, operand 1, single buffered']
    #allocation6 [shape = 's32[1]{0}', space=sflag, size = 0x4, scoped, tag = 'scoped memory for tpu_custom_call.1']
    #allocation7 [shape = 'u8[38912]{0}', space=vmem, size = 0x9800, scoped, tag = 'input window, operand 2, single buffered']
    #allocation8 [shape = 'u8[8192]{0}', space=vmem, size = 0x2000, scoped, tag = 'output window, operand 0, single buffered']
    %8 = vsyncpa [#allocation3], 0
    %9 = vsyncpa [#allocation6], 0
    %10 = vsyncpa [#allocation4], 0
    // Predicated region
    $region2: #{tpu_custom_call.1} parent=1 // pred_check
      _
    $region3: #{tpu_custom_call.1} parent=1 // pred_check_branch
      %12 = sbr.rel (0) target = $region5
    $region4: #{tpu_custom_call.1} parent=1 // pred_region
      %s14 = ssub.s32 128, 128
      %15 = vsyncadd [#allocation3], %s14
      %s16 = sshll.u32 [#allocation2], 4
      %s17 = int_to_ptr.vmem [resolvable:$true] %s16
      %22 = dma.hbm_to_vmem [thread:$0]  %s0, 128, %s17, [#allocation3], 64, 64, 4
    $region5: #{tpu_custom_call.1} parent=1 // pred_fallthru
      _
    // Predicated region
    $region6: #{tpu_custom_call.1} parent=1 // pred_check
      _
    $region7: #{tpu_custom_call.1} parent=1 // pred_check_branch
      %24 = sbr.rel (0) target = $region9
    $region8: #{tpu_custom_call.1} parent=1 // pred_region
      %s26 = ssub.s32 4096, 4096
      %27 = vsyncadd [#allocation6], %s26
      %s28 = sshll.u32 [#allocation5], 4
      %s29 = int_to_ptr.vmem [resolvable:$true] %s28
      %34 = dma.hbm_to_vmem [thread:$0]  %s1, 4096, %s29, [#allocation6], 128, 128, 8
    $region9: #{tpu_custom_call.1} parent=1 // pred_fallthru
      _
    // Predicated region
    $region10: #{tpu_custom_call.1} parent=1 // pred_check
      _
    $region11: #{tpu_custom_call.1} parent=1 // pred_check_branch
      %36 = sbr.rel (0) target = $region13
    $region12: #{tpu_custom_call.1} parent=1 // pred_region
      %s38 = ssub.s32 1216, 1216
      %39 = vsyncadd [#allocation6], %s38
      %s40 = sshll.u32 [#allocation7], 4
      %s41 = int_to_ptr.vmem [resolvable:$true] %s40
      %46 = dma.hbm_to_vmem [thread:$0]  %s2, 1216, %s41, [#allocation6], 64, 64, 4
    $region13: #{tpu_custom_call.1} parent=1 // pred_fallthru
      _
    // Predicated region
    $region14: #{tpu_custom_call.1} parent=1 // pred_check
      _
    $region15: #{tpu_custom_call.1} parent=1 // pred_check_branch
      %48 = sbr.rel (0) target = $region17
    $region16: #{tpu_custom_call.1} parent=1 // pred_region
      %49 = dma.done [#allocation3], 128
    $region17: #{tpu_custom_call.1} parent=1 // pred_fallthru
      _
    // Predicated region
    $region18: #{tpu_custom_call.1} parent=1 // pred_check
      _
    $region19: #{tpu_custom_call.1} parent=1 // pred_check_branch
      %51 = sbr.rel (0) target = $region21
    $region20: #{tpu_custom_call.1} parent=1 // pred_region
      %52 = dma.done [#allocation6], 4096
    $region21: #{tpu_custom_call.1} parent=1 // pred_fallthru
      _
    // Predicated region
    $region22: #{tpu_custom_call.1} parent=1 // pred_check
      _
    $region23: #{tpu_custom_call.1} parent=1 // pred_check_branch
      %54 = sbr.rel (0) target = $region25
    $region24: #{tpu_custom_call.1} parent=1 // pred_region
      %55 = dma.done [#allocation6], 1216
    $region25: #{tpu_custom_call.1} parent=1 // pred_fallthru
      _
    %v57 = vld [vmem:[#allocation2] sm:$0xf]
    %v58 = vld [vmem:[#allocation2 + $0x4] sm:$0xf]
    %v59 = vld [vmem:[#allocation5] sm:$0xff]
    %v60 = vld [vmem:[#allocation5 + $0x8] sm:$0xff]
    %v61 = vld [vmem:[#allocation5 + $0x10] sm:$0xff]
    %v62 = vld [vmem:[#allocation5 + $0x18] sm:$0xff]
    %v63 = vld [vmem:[#allocation5 + $0x20] sm:$0xff]
    %v64 = vld [vmem:[#allocation5 + $0x28] sm:$0xff]
    %v65 = vld [vmem:[#allocation5 + $0x30] sm:$0xff]
    %v66 = vld [vmem:[#allocation5 + $0x38] sm:$0xff]
    %v69 = vunpack.c.l.b16 %v57
    %v70 = vunpack.c.l.b16 %v58
    %v71 = vpack.c.b16 %v70, %v69
    %v80 = vunpack.c.l.b16 %v59
    %v81 = vunpack.c.h.b16 %v59
    %v82 = vunpack.c.l.b16 %v60
    %v83 = vunpack.c.h.b16 %v60
    %v84 = vunpack.c.l.b16 %v61
    %v85 = vunpack.c.h.b16 %v61
    %v86 = vunpack.c.l.b16 %v62
    %v87 = vunpack.c.h.b16 %v62
    %v88 = vunpack.c.l.b16 %v63
    %v89 = vunpack.c.h.b16 %v63
    %v90 = vunpack.c.l.b16 %v64
    %v91 = vunpack.c.h.b16 %v64
    %v92 = vunpack.c.l.b16 %v65
    %v93 = vunpack.c.h.b16 %v65
    %v94 = vunpack.c.l.b16 %v66
    %v95 = vunpack.c.h.b16 %v66
    %v96 = vpack.c.b16 %v82, %v80
    %v97 = vpack.c.b16 %v83, %v81
    %v98 = vpack.c.b16 %v86, %v84
    %v99 = vpack.c.b16 %v87, %v85
    %v100 = vpack.c.b16 %v90, %v88
    %v101 = vpack.c.b16 %v91, %v89
    %v102 = vpack.c.b16 %v94, %v92
    %v103 = vpack.c.b16 %v95, %v93
    %vm112 = vcmask 523264
    %v114 = vsel %vm112, %v71, 0
    %116 = vmatprep.subr.bf16.mxu0 %v97
    %117 = vmatpush1.bf16.msra.mxu0 %v96
    %118 = vmatprep.subr.bf16.mxu0 %v99
    %119 = vmatpush1.bf16.msra.mxu0 %v98
    %120 = vmatprep.subr.bf16.mxu0 %v101
    %121 = vmatpush1.bf16.msra.mxu0 %v100
    %122 = vmatprep.subr.bf16.mxu0 %v103
    %123 = vmatpush1.bf16.msra.mxu0 %v102
    %124 = vmatprep.subr.bf16.mxu0 0
    %125 = vmatpush1.bf16.msra.mxu0 0
    %126 = vmatprep.subr.bf16.mxu0 0
    %127 = vmatpush1.bf16.msra.mxu0 0
    %128 = vmatprep.subr.bf16.mxu0 0
    %129 = vmatpush1.bf16.msra.mxu0 0
    %130 = vmatprep.subr.bf16.mxu0 0
    %131 = vmatpush1.bf16.msra.mxu0 0
    %132 = vmatprep.subr.bf16.mxu0 0
    %133 = vmatpush1.bf16.msra.mxu0 0
    %134 = vmatprep.subr.bf16.mxu0 0
    %135 = vmatpush1.bf16.msra.mxu0 0
    %136 = vmatprep.subr.bf16.mxu0 0
    %137 = vmatpush1.bf16.msra.mxu0 0
    %138 = vmatprep.subr.bf16.mxu0 0
    %139 = vmatpush1.bf16.msra.mxu0 0
    %140 = vmatprep.subr.bf16.mxu0 0
    %141 = vmatpush1.bf16.msra.mxu0 0
    %142 = vmatprep.subr.bf16.mxu0 0
    %143 = vmatpush1.bf16.msra.mxu0 0
    %144 = vmatprep.subr.bf16.mxu0 0
    %145 = vmatpush1.bf16.msra.mxu0 0
    %146 = vmatprep.subr.bf16.mxu0 0
    %147 = vmatpush1.bf16.msra.mxu0 0
    %148 = vmatprep.mubr.bf16.mxu0 0
    %149 = vmatmul.mubr.bf16.gmra.mrb[0].mxu0 %v114
    %v150 = vpop.f32.mrb[0].mxu0
    %v151 = vadd.f32 0.0, %v150
    %v152 = vpop.f32.mrb[0].mxu0
    %v153 = vadd.f32 0.0, %v152
    %v154 = vpop.f32.mrb[0].mxu0
    %v155 = vadd.f32 0.0, %v154
    %v156 = vpop.f32.mrb[0].mxu0
    %v157 = vadd.f32 0.0, %v156
    %158 = vdwg.mxu0
    %s159 = scalar_lea.vmem [#allocation5], 64
    %v160 = vld [vmem:[%s159] sm:$0xff]
    %v161 = vld [vmem:[%s159 + $0x8] sm:$0xff]
    %v162 = vld [vmem:[%s159 + $0x10] sm:$0xff]
    %v163 = vld [vmem:[%s159 + $0x18] sm:$0xff]
    %v164 = vld [vmem:[%s159 + $0x20] sm:$0xff]
    %v165 = vld [vmem:[%s159 + $0x28] sm:$0xff]
    %v166 = vld [vmem:[%s159 + $0x30] sm:$0xff]
    %v167 = vld [vmem:[%s159 + $0x38] sm:$0xff]
    %v176 = vunpack.c.l.b16 %v160
    %v177 = vunpack.c.h.b16 %v160
    %v178 = vunpack.c.l.b16 %v161
    %v179 = vunpack.c.h.b16 %v161
    %v180 = vunpack.c.l.b16 %v162
    %v181 = vunpack.c.h.b16 %v162
    %v182 = vunpack.c.l.b16 %v163
    %v183 = vunpack.c.h.b16 %v163
    %v184 = vunpack.c.l.b16 %v164
    %v185 = vunpack.c.h.b16 %v164
    %v186 = vunpack.c.l.b16 %v165
    %v187 = vunpack.c.h.b16 %v165
    %v188 = vunpack.c.l.b16 %v166
    %v189 = vunpack.c.h.b16 %v166
    %v190 = vunpack.c.l.b16 %v167
    %v191 = vunpack.c.h.b16 %v167
    %v192 = vpack.c.b16 %v178, %v176
    %v193 = vpack.c.b16 %v179, %v177
    %v194 = vpack.c.b16 %v182, %v180
    %v195 = vpack.c.b16 %v183, %v181
    %v196 = vpack.c.b16 %v186, %v184
    %v197 = vpack.c.b16 %v187, %v185
    %v198 = vpack.c.b16 %v190, %v188
    %v199 = vpack.c.b16 %v191, %v189
    %208 = vmatprep.subr.bf16.mxu0 %v193
    %209 = vmatpush1.bf16.msra.mxu0 %v192
    %210 = vmatprep.subr.bf16.mxu0 %v195
    %211 = vmatpush1.bf16.msra.mxu0 %v194
    %212 = vmatprep.subr.bf16.mxu0 %v197
    %213 = vmatpush1.bf16.msra.mxu0 %v196
    %214 = vmatprep.subr.bf16.mxu0 %v199
    %215 = vmatpush1.bf16.msra.mxu0 %v198
    %216 = vmatprep.subr.bf16.mxu0 0
    %217 = vmatpush1.bf16.msra.mxu0 0
    %218 = vmatprep.subr.bf16.mxu0 0
    %219 = vmatpush1.bf16.msra.mxu0 0
    %220 = vmatprep.subr.bf16.mxu0 0
    %221 = vmatpush1.bf16.msra.mxu0 0
    %222 = vmatprep.subr.bf16.mxu0 0
    %223 = vmatpush1.bf16.msra.mxu0 0
    %224 = vmatprep.subr.bf16.mxu0 0
    %225 = vmatpush1.bf16.msra.mxu0 0
    %226 = vmatprep.subr.bf16.mxu0 0
    %227 = vmatpush1.bf16.msra.mxu0 0
    %228 = vmatprep.subr.bf16.mxu0 0
    %229 = vmatpush1.bf16.msra.mxu0 0
    %230 = vmatprep.subr.bf16.mxu0 0
    %231 = vmatpush1.bf16.msra.mxu0 0
    %232 = vmatprep.subr.bf16.mxu0 0
    %233 = vmatpush1.bf16.msra.mxu0 0
    %234 = vmatprep.subr.bf16.mxu0 0
    %235 = vmatpush1.bf16.msra.mxu0 0
    %236 = vmatprep.subr.bf16.mxu0 0
    %237 = vmatpush1.bf16.msra.mxu0 0
    %238 = vmatprep.subr.bf16.mxu0 0
    %239 = vmatpush1.bf16.msra.mxu0 0
    %240 = vmatprep.mubr.bf16.mxu0 0
    %241 = vmatmul.mubr.bf16.gmra.mrb[0].mxu0 %v114
    %v242 = vpop.f32.mrb[0].mxu0
    %v243 = vadd.f32 0.0, %v242
    %v244 = vpop.f32.mrb[0].mxu0
    %v245 = vadd.f32 0.0, %v244
    %v246 = vpop.f32.mrb[0].mxu0
    %v247 = vadd.f32 0.0, %v246
    %v248 = vpop.f32.mrb[0].mxu0
    %v249 = vadd.f32 0.0, %v248
    %250 = vdwg.mxu0
    %v251 = vmax.f32 %v151, %v243
    %v252 = vmax.f32 %v153, %v245
    %v253 = vmax.f32 %v155, %v247
    %v254 = vmax.f32 %v157, %v249
    %s255 = scalar_lea.vmem [#allocation5], 128
    %v256 = vld [vmem:[%s255] sm:$0xff]
    %v257 = vld [vmem:[%s255 + $0x8] sm:$0xff]
    %v258 = vld [vmem:[%s255 + $0x10] sm:$0xff]
    %v259 = vld [vmem:[%s255 + $0x18] sm:$0xff]
    %v260 = vld [vmem:[%s255 + $0x20] sm:$0xff]
    %v261 = vld [vmem:[%s255 + $0x28] sm:$0xff]
    %v262 = vld [vmem:[%s255 + $0x30] sm:$0xff]
    %v263 = vld [vmem:[%s255 + $0x38] sm:$0xff]
    %v272 = vunpack.c.l.b16 %v256
    %v273 = vunpack.c.h.b16 %v256
    %v274 = vunpack.c.l.b16 %v257
    %v275 = vunpack.c.h.b16 %v257
    %v276 = vunpack.c.l.b16 %v258
    %v277 = vunpack.c.h.b16 %v258
    %v278 = vunpack.c.l.b16 %v259
    %v279 = vunpack.c.h.b16 %v259
    %v280 = vunpack.c.l.b16 %v260
    %v281 = vunpack.c.h.b16 %v260
    %v282 = vunpack.c.l.b16 %v261
    %v283 = vunpack.c.h.b16 %v261
    %v284 = vunpack.c.l.b16 %v262
    %v285 = vunpack.c.h.b16 %v262
    %v286 = vunpack.c.l.b16 %v263
    %v287 = vunpack.c.h.b16 %v263
    %v288 = vpack.c.b16 %v274, %v272
    %v289 = vpack.c.b16 %v275, %v273
    %v290 = vpack.c.b16 %v278, %v276
    %v291 = vpack.c.b16 %v279, %v277
    %v292 = vpack.c.b16 %v282, %v280
    %v293 = vpack.c.b16 %v283, %v281
    %v294 = vpack.c.b16 %v286, %v284
    %v295 = vpack.c.b16 %v287, %v285
    %304 = vmatprep.subr.bf16.mxu0 %v289
    %305 = vmatpush1.bf16.msra.mxu0 %v288
    %306 = vmatprep.subr.bf16.mxu0 %v291
    %307 = vmatpush1.bf16.msra.mxu0 %v290
    %308 = vmatprep.subr.bf16.mxu0 %v293
    %309 = vmatpush1.bf16.msra.mxu0 %v292
    %310 = vmatprep.subr.bf16.mxu0 %v295
    %311 = vmatpush1.bf16.msra.mxu0 %v294
    %312 = vmatprep.subr.bf16.mxu0 0
    %313 = vmatpush1.bf16.msra.mxu0 0
    %314 = vmatprep.subr.bf16.mxu0 0
    %315 = vmatpush1.bf16.msra.mxu0 0
    %316 = vmatprep.subr.bf16.mxu0 0
    %317 = vmatpush1.bf16.msra.mxu0 0
    %318 = vmatprep.subr.bf16.mxu0 0
    %319 = vmatpush1.bf16.msra.mxu0 0
    %320 = vmatprep.subr.bf16.mxu0 0
    %321 = vmatpush1.bf16.msra.mxu0 0
    %322 = vmatprep.subr.bf16.mxu0 0
    %323 = vmatpush1.bf16.msra.mxu0 0
    %324 = vmatprep.subr.bf16.mxu0 0
    %325 = vmatpush1.bf16.msra.mxu0 0
    %326 = vmatprep.subr.bf16.mxu0 0
    %327 = vmatpush1.bf16.msra.mxu0 0
    %328 = vmatprep.subr.bf16.mxu0 0
    %329 = vmatpush1.bf16.msra.mxu0 0
    %330 = vmatprep.subr.bf16.mxu0 0
    %331 = vmatpush1.bf16.msra.mxu0 0
    %332 = vmatprep.subr.bf16.mxu0 0
    %333 = vmatpush1.bf16.msra.mxu0 0
    %334 = vmatprep.subr.bf16.mxu0 0
    %335 = vmatpush1.bf16.msra.mxu0 0
    %336 = vmatprep.mubr.bf16.mxu0 0
    %337 = vmatmul.mubr.bf16.gmra.mrb[0].mxu0 %v114
    %v338 = vpop.f32.mrb[0].mxu0
    %v339 = vadd.f32 0.0, %v338
    %v340 = vpop.f32.mrb[0].mxu0
    %v341 = vadd.f32 0.0, %v340
    %v342 = vpop.f32.mrb[0].mxu0
    %v343 = vadd.f32 0.0, %v342
    %v344 = vpop.f32.mrb[0].mxu0
    %v345 = vadd.f32 0.0, %v344
    %346 = vdwg.mxu0
    %v347 = vmax.f32 %v251, %v339
    %v348 = vmax.f32 %v252, %v341
    %v349 = vmax.f32 %v253, %v343
    %v350 = vmax.f32 %v254, %v345
    %s351 = scalar_lea.vmem [#allocation5], 192
    %v352 = vld [vmem:[%s351] sm:$0xff]
    %v353 = vld [vmem:[%s351 + $0x8] sm:$0xff]
    %v354 = vld [vmem:[%s351 + $0x10] sm:$0xff]
    %v355 = vld [vmem:[%s351 + $0x18] sm:$0xff]
    %v356 = vld [vmem:[%s351 + $0x20] sm:$0xff]
    %v357 = vld [vmem:[%s351 + $0x28] sm:$0xff]
    %v358 = vld [vmem:[%s351 + $0x30] sm:$0xff]
    %v359 = vld [vmem:[%s351 + $0x38] sm:$0xff]
    %v368 = vunpack.c.l.b16 %v352
    %v369 = vunpack.c.h.b16 %v352
    %v370 = vunpack.c.l.b16 %v353
    %v371 = vunpack.c.h.b16 %v353
    %v372 = vunpack.c.l.b16 %v354
    %v373 = vunpack.c.h.b16 %v354
    %v374 = vunpack.c.l.b16 %v355
    %v375 = vunpack.c.h.b16 %v355
    %v376 = vunpack.c.l.b16 %v356
    %v377 = vunpack.c.h.b16 %v356
    %v378 = vunpack.c.l.b16 %v357
    %v379 = vunpack.c.h.b16 %v357
    %v380 = vunpack.c.l.b16 %v358
    %v381 = vunpack.c.h.b16 %v358
    %v382 = vunpack.c.l.b16 %v359
    %v383 = vunpack.c.h.b16 %v359
    %v384 = vpack.c.b16 %v370, %v368
    %v385 = vpack.c.b16 %v371, %v369
    %v386 = vpack.c.b16 %v374, %v372
    %v387 = vpack.c.b16 %v375, %v373
    %v388 = vpack.c.b16 %v378, %v376
    %v389 = vpack.c.b16 %v379, %v377
    %v390 = vpack.c.b16 %v382, %v380
    %v391 = vpack.c.b16 %v383, %v381
    %400 = vmatprep.subr.bf16.mxu0 %v385
    %401 = vmatpush1.bf16.msra.mxu0 %v384
    %402 = vmatprep.subr.bf16.mxu0 %v387
    %403 = vmatpush1.bf16.msra.mxu0 %v386
    %404 = vmatprep.subr.bf16.mxu0 %v389
    %405 = vmatpush1.bf16.msra.mxu0 %v388
    %406 = vmatprep.subr.bf16.mxu0 %v391
    %407 = vmatpush1.bf16.msra.mxu0 %v390
    %408 = vmatprep.subr.bf16.mxu0 0
    %409 = vmatpush1.bf16.msra.mxu0 0
    %410 = vmatprep.subr.bf16.mxu0 0
    %411 = vmatpush1.bf16.msra.mxu0 0
    %412 = vmatprep.subr.bf16.mxu0 0
    %413 = vmatpush1.bf16.msra.mxu0 0
    %414 = vmatprep.subr.bf16.mxu0 0
    %415 = vmatpush1.bf16.msra.mxu0 0
    %416 = vmatprep.subr.bf16.mxu0 0
    %417 = vmatpush1.bf16.msra.mxu0 0
    %418 = vmatprep.subr.bf16.mxu0 0
    %419 = vmatpush1.bf16.msra.mxu0 0
    %420 = vmatprep.subr.bf16.mxu0 0
    %421 = vmatpush1.bf16.msra.mxu0 0
    %422 = vmatprep.subr.bf16.mxu0 0
    %423 = vmatpush1.bf16.msra.mxu0 0
    %424 = vmatprep.subr.bf16.mxu0 0
    %425 = vmatpush1.bf16.msra.mxu0 0
    %426 = vmatprep.subr.bf16.mxu0 0
    %427 = vmatpush1.bf16.msra.mxu0 0
    %428 = vmatprep.subr.bf16.mxu0 0
    %429 = vmatpush1.bf16.msra.mxu0 0
    %430 = vmatprep.subr.bf16.mxu0 0
    %431 = vmatpush1.bf16.msra.mxu0 0
    %432 = vmatprep.mubr.bf16.mxu0 0
    %433 = vmatmul.mubr.bf16.gmra.mrb[0].mxu0 %v114
    %v434 = vpop.f32.mrb[0].mxu0
    %v435 = vadd.f32 0.0, %v434
    %v436 = vpop.f32.mrb[0].mxu0
    %v437 = vadd.f32 0.0, %v436
    %v438 = vpop.f32.mrb[0].mxu0
    %v439 = vadd.f32 0.0, %v438
    %v440 = vpop.f32.mrb[0].mxu0
    %v441 = vadd.f32 0.0, %v440
    %442 = vdwg.mxu0
    %v443 = vmax.f32 %v347, %v435
    %v444 = vmax.f32 %v348, %v437
    %v445 = vmax.f32 %v349, %v439
    %v446 = vmax.f32 %v350, %v441
    %v447 = vmax.f32 %v443, 0.0
    %v448 = vmax.f32 %v444, 0.0
    %v449 = vmax.f32 %v445, 0.0
    %v450 = vmax.f32 %v446, 0.0
    %v451 = vpack.c.bf16 %v449, %v447
    %v452 = vpack.c.bf16 %v450, %v448
    %v453 = vld [vmem:[#allocation7] sm:$0xf]
    %v454 = vld [vmem:[#allocation7 + $0x4] sm:$0xf]
    %v455 = vld [vmem:[#allocation7 + $0x8] sm:$0xf]
    %v456 = vld [vmem:[#allocation7 + $0xc] sm:$0xf]
    %v457 = vld [vmem:[#allocation7 + $0x10] sm:$0xf]
    %v458 = vld [vmem:[#allocation7 + $0x14] sm:$0xf]
    %v459 = vld [vmem:[#allocation7 + $0x18] sm:$0xf]
    %v460 = vld [vmem:[#allocation7 + $0x1c] sm:$0xf]
    %v461 = vld [vmem:[#allocation7 + $0x20] sm:$0xf]
    %v462 = vld [vmem:[#allocation7 + $0x24] sm:$0xf]
    %v463 = vld [vmem:[#allocation7 + $0x28] sm:$0xf]
    %v464 = vld [vmem:[#allocation7 + $0x2c] sm:$0xf]
    %v465 = vld [vmem:[#allocation7 + $0x30] sm:$0xf]
    %v466 = vld [vmem:[#allocation7 + $0x34] sm:$0xf]
    %v467 = vld [vmem:[#allocation7 + $0x38] sm:$0xf]
    %v468 = vld [vmem:[#allocation7 + $0x3c] sm:$0xf]
    %v469 = vld [vmem:[#allocation7 + $0x40] sm:$0xf]
    %v470 = vld [vmem:[#allocation7 + $0x44] sm:$0xf]
    %v471 = vld [vmem:[#allocation7 + $0x48] sm:$0x1]
    %v491 = vunpack.c.l.b16 %v453
    %v492 = vunpack.c.l.b16 %v454
    %v493 = vunpack.c.l.b16 %v455
    %v494 = vunpack.c.l.b16 %v456
    %v495 = vunpack.c.l.b16 %v457
    %v496 = vunpack.c.l.b16 %v458
    %v497 = vunpack.c.l.b16 %v459
    %v498 = vunpack.c.l.b16 %v460
    %v499 = vunpack.c.l.b16 %v461
    %v500 = vunpack.c.l.b16 %v462
    %v501 = vunpack.c.l.b16 %v463
    %v502 = vunpack.c.l.b16 %v464
    %v503 = vunpack.c.l.b16 %v465
    %v504 = vunpack.c.l.b16 %v466
    %v505 = vunpack.c.l.b16 %v467
    %v506 = vunpack.c.l.b16 %v468
    %v507 = vunpack.c.l.b16 %v469
    %v508 = vunpack.c.l.b16 %v470
    %v509 = vunpack.c.l.b16 %v471
    %v510 = vpack.c.b16 %v492, %v491
    %v511 = vpack.c.b16 %v494, %v493
    %v512 = vpack.c.b16 %v496, %v495
    %v513 = vpack.c.b16 %v498, %v497
    %v514 = vpack.c.b16 %v500, %v499
    %v515 = vpack.c.b16 %v502, %v501
    %v516 = vpack.c.b16 %v504, %v503
    %v517 = vpack.c.b16 %v506, %v505
    %v518 = vpack.c.b16 %v508, %v507
    %v519 = vpack.c.b16 %v509, %v509
    %vm529 = vcmask 138240
    %v531 = vsel %vm529, %v452, 0
    %vm533 = vcmask 1040384
    %v534 = vsel 0, 4294967295, 65535
    %v535 = vsel %vm533, %v534, 0
    %v537 = vand.u32 %v519, %v535
    %539 = vmatprep.subr.bf16.mxu0 0
    %540 = vmatpush1.bf16.msra.mxu0 %v510
    %541 = vmatprep.subr.bf16.mxu0 0
    %542 = vmatpush1.bf16.msra.mxu0 %v511
    %543 = vmatprep.subr.bf16.mxu0 0
    %544 = vmatpush1.bf16.msra.mxu0 %v512
    %545 = vmatprep.subr.bf16.mxu0 0
    %546 = vmatpush1.bf16.msra.mxu0 %v513
    %547 = vmatprep.subr.bf16.mxu0 0
    %548 = vmatpush1.bf16.msra.mxu0 %v514
    %549 = vmatprep.subr.bf16.mxu0 0
    %550 = vmatpush1.bf16.msra.mxu0 %v515
    %551 = vmatprep.subr.bf16.mxu0 0
    %552 = vmatpush1.bf16.msra.mxu0 %v516
    %553 = vmatprep.subr.bf16.mxu0 0
    %554 = vmatpush1.bf16.msra.mxu0 %v517
    %555 = vmatprep.subr.bf16.mxu0 0
    %556 = vmatpush1.bf16.msra.mxu0 %v518
    %557 = vmatprep.subr.bf16.mxu0 0
    %558 = vmatpush1.bf16.msra.mxu0 %v537
    %559 = vmatprep.subr.bf16.mxu0 0
    %560 = vmatpush1.bf16.msra.mxu0 0
    %561 = vmatprep.subr.bf16.mxu0 0
    %562 = vmatpush1.bf16.msra.mxu0 0
    %563 = vmatprep.subr.bf16.mxu0 0
    %564 = vmatpush1.bf16.msra.mxu0 0
    %565 = vmatprep.subr.bf16.mxu0 0
    %566 = vmatpush1.bf16.msra.mxu0 0
    %567 = vmatprep.subr.bf16.mxu0 0
    %568 = vmatpush1.bf16.msra.mxu0 0
    %569 = vmatprep.subr.bf16.mxu0 0
    %570 = vmatpush1.bf16.msra.mxu0 0
    %571 = vmatprep.mubr.bf16.mxu0 %v531
    %572 = vmatmul.mubr.bf16.gmra.mrb[0].mxu0 %v451
    %v573 = vpop.f32.mrb[0].mxu0
    %v574 = vadd.f32 0.0, %v573
    %v575 = vpop.f32.mrb[0].mxu0
    %v576 = vpop.f32.mrb[0].mxu0
    %v577 = vadd.f32 0.0, %v576
    %v578 = vpop.f32.mrb[0].mxu0
    %579 = vdwg.mxu0
    %580 = vmax.xlane.f32.xlu0 %v574
    %v581 = vpop.xlane.xlu0 %580
    %582 = vmax.xlane.f32.xlu0 %v577
    %v583 = vpop.xlane.xlu0 %582
    %v584 = vsub.f32 %v574, %v581
    %v585 = vsub.f32 %v577, %v583
    %v586 = vmul.f32 %v584, 1.442695
    %v587 = vpow.pop %v586
    %v588 = vmul.f32 %v585, 1.442695
    %v589 = vpow.pop %v588
    %590 = vadd.xlane.f32.xlu0 %v587
    %v591 = vpop.xlane.xlu0 %590
    %592 = vadd.xlane.f32.xlu0 %v589
    %v593 = vpop.xlane.xlu0 %592
    %v594 = vlog2.pop %v591
    %v595 = vmul.f32 %v594, 0.6931472
    %v596 = vlog2.pop %v593
    %v597 = vmul.f32 %v596, 0.6931472
    %v598 = vsub.f32 %v584, %v595
    %v599 = vsub.f32 %v585, %v597
    %600 = vst [vmem:[#allocation8] sm:$0xff] %v598
    %601 = vst [vmem:[#allocation8 + $0x8] sm:$0xff] %v599
    // Predicated region
    $region26: #{tpu_custom_call.1} parent=1 // pred_check
      _
    $region27: #{tpu_custom_call.1} parent=1 // pred_check_branch
      %603 = sbr.rel (0) target = $region29
    $region28: #{tpu_custom_call.1} parent=1 // pred_region
      %s605 = ssub.s32 256, 256
      %606 = vsyncadd [#allocation4], %s605
      %s607 = sshll.u32 [#allocation8], 4
      %s608 = int_to_ptr.vmem [resolvable:$true] %s607
      %613 = dma.vmem_to_hbm [thread:$0]  %s608, 256, %s3, [#allocation4], 128, 128, 8
    $region29: #{tpu_custom_call.1} parent=1 // pred_fallthru
      _
    // Predicated region
    $region30: #{tpu_custom_call.1} parent=1 // pred_check
      _
    $region31: #{tpu_custom_call.1} parent=1 // pred_check_branch
      %615 = sbr.rel (0) target = $region33
    $region32: #{tpu_custom_call.1} parent=1 // pred_region
      %616 = dma.done [#allocation4], 256
    $region33: #{tpu_custom_call.1} parent=1 // pred_fallthru
      _
    %617 = vsyncpa [#allocation3], 1
    %618 = vsyncpa [#allocation6], 1
    %619 = vsyncpa [#allocation4], 1

</llo_original>
